<compile_context>
chip_gen: v5e
topology: v5e:2x2
jax: 0.10.0
libtpu: 0.0.40
codegen_flags: <defaults>
</compile_context>

<pallas_src>
import functools

import jax
import jax.numpy as jnp
from jax.experimental import pallas as pl
from jax.experimental.pallas import tpu as pltpu


# ----------------------------- Pallas kernels ------------------------------ #

def _fused_kernel(x_ref, w1_ref, w2_ref, o_ref, *, inv_l, true_l, needs_mask):
    """Single-pass: pool + MLP + sigmoid + scale for one batch slab.

    x_ref: (1, C, Lp)   w1_ref: (Cr, C)   w2_ref: (C, Cr)   o_ref: (1, C, Lp)
    """
    x = x_ref[0]                                   # (C, Lp), input dtype
    xf = x.astype(jnp.float32)

    if needs_mask:
        lane = jax.lax.broadcasted_iota(jnp.int32, xf.shape, 1)
        x_for_max = jnp.where(lane < true_l, xf, -jnp.inf)
    else:
        x_for_max = xf

    avg = jnp.sum(xf, axis=-1, keepdims=True) * inv_l        # AdaptiveAvgPool1d(1), (C, 1)
    mx = jnp.max(x_for_max, axis=-1, keepdims=True)          # AdaptiveMaxPool1d(1), (C, 1)

    w1 = w1_ref[...].astype(jnp.float32)                     # (Cr, C)
    w2 = w2_ref[...].astype(jnp.float32)                     # (C, Cr)

    # fc(avg) + fc(max) == W2 @ (relu(W1@avg) + relu(W1@max)); one W1 push by
    # stacking avg/max as two lane columns.
    pooled = jnp.concatenate([avg, mx], axis=-1)              # (C, 2)
    h = jnp.maximum(jnp.dot(w1, pooled,
                            preferred_element_type=jnp.float32), 0.0)   # (Cr, 2)
    h = jnp.sum(h, axis=-1, keepdims=True)                    # (Cr, 1)
    att = jax.nn.sigmoid(jnp.dot(w2, h,
                                 preferred_element_type=jnp.float32))   # (C, 1)

    if x.dtype == jnp.bfloat16:
        o_ref[0] = x * att.astype(x.dtype)                    # bf16 VPU path
    else:
        o_ref[0] = (xf * att).astype(o_ref.dtype)


def _partial_pool_kernel(x_ref, pooled_ref, sum_sc, max_sc, *,
                         tile_l, true_l, needs_mask, n_l_per):
    """Running sum/max over L tiles of one L-split (fallback path, kernel 1).

    x_ref: (1, C, tile_l)   pooled_ref: (1, 1, C, 2)
    sum_sc / max_sc: (C, 128) VPU accumulators (XLU reduce only at finalize).
    """
    s_idx = pl.program_id(1)
    l = pl.program_id(2)

    @pl.when(l == 0)
    def _():
        sum_sc[...] = jnp.zeros_like(sum_sc)
        max_sc[...] = jnp.full_like(max_sc, -jnp.inf)

    c = sum_sc.shape[0]
    n_chunks = tile_l // 128

    def body(k, carry):
        off = pl.multiple_of(k * 128, 128)
        xc = x_ref[0, :, pl.ds(off, 128)].astype(jnp.float32)   # (C, 128)
        sum_sc[...] += xc
        if needs_mask:
            base = (s_idx * n_l_per + l) * tile_l + k * 128
            lane = jax.lax.broadcasted_iota(jnp.int32, (c, 128), 1) + base
            xc = jnp.where(lane < true_l, xc, -jnp.inf)
        max_sc[...] = jnp.maximum(max_sc[...], xc)
        return carry

    jax.lax.fori_loop(0, n_chunks, body, 0, unroll=(n_chunks <= 8))

    @pl.when(l == pl.num_programs(2) - 1)
    def _():
        s = jnp.sum(sum_sc[...], axis=-1, keepdims=True)       # (C, 1)
        m = jnp.max(max_sc[...], axis=-1, keepdims=True)       # (C, 1)
        pooled_ref[0, 0] = jnp.concatenate([s, m], axis=-1)    # (C, 2)


def _scale_kernel(x_ref, att_ref, o_ref):
    """Lane-dense elementwise x * att (fallback path, kernel 2)."""
    x = x_ref[...]
    att = att_ref[...]
    if x.dtype == jnp.bfloat16:
        o_ref[...] = x * att.astype(x.dtype)
    else:
        o_ref[...] = (x.astype(jnp.float32) * att.astype(jnp.float32)).astype(o_ref.dtype)


# ------------------------------ Pallas wrapper ------------------------------ #

def _vmem_budget():
    """Generation-aware VMEM limit (v7x: 64 MiB physical; v5e/v6e: 128 MiB)."""
    try:
        cap = int(pltpu.get_tpu_info().vmem_capacity_bytes)
    except Exception:
        cap = 64 * 1024 * 1024   # conservative (v7x) fallback
    return min(int(cap * 0.75), 100 * 1024 * 1024)


def _pick_tile_l(l_pad, c, itemsize, max_tile_bytes):
    """Largest multiple-of-128 divisor of l_pad whose (C, tL) tile fits."""
    best = 128
    t = 128
    while t <= l_pad:
        if l_pad % t == 0 and c * t * itemsize <= max_tile_bytes:
            best = t
        t += 128
    return best


def channel_attention_forward(x, w1, w2, *, force_two_kernel=False,
                              two_kernel_tile_l=None):
    """x: (B, C, L); w1: (Cr, C) [Conv1d C->Cr, k=1, no bias]; w2: (C, Cr)."""
    B, C, L = x.shape
    Cr = w1.shape[0]
    itemsize = x.dtype.itemsize

    vmem_limit = _vmem_budget()
    work_budget = int(vmem_limit * 0.85)

    # Pad L up to a multiple of 128 (lane-dense tiles, bounded VMEM blocks).
    Lp = L if L % 128 == 0 else ((L + 127) // 128) * 128
    needs_mask = Lp != L
    xp = x if not needs_mask else jnp.pad(x, ((0, 0), (0, 0), (0, Lp - L)))

    # ---------------- fused single-pass path (preferred) ---------------- #
    slab = C * Lp * itemsize
    f32_slab = C * Lp * 4
    fused_bytes = 4 * slab + 2 * f32_slab + 4 * Cr * C * 4   # 2x in + 2x out bufs + f32 work + weights
    if (not force_two_kernel) and fused_bytes <= work_budget:
        out_p = pl.pallas_call(
            functools.partial(_fused_kernel, inv_l=1.0 / L, true_l=L,
                              needs_mask=needs_mask),
            out_shape=jax.ShapeDtypeStruct((B, C, Lp), x.dtype),
            grid=(B,),
            in_specs=[pl.BlockSpec((1, C, Lp), lambda b: (b, 0, 0)),
                      pl.BlockSpec((Cr, C), lambda b: (0, 0)),   # resident weights
                      pl.BlockSpec((C, Cr), lambda b: (0, 0))],
            out_specs=pl.BlockSpec((1, C, Lp), lambda b: (b, 0, 0)),
            compiler_params=pltpu.CompilerParams(
                dimension_semantics=("parallel",),
                vmem_limit_bytes=vmem_limit),
        )(xp, w1, w2)
        return out_p if not needs_mask else out_p[:, :, :L]

    # --------------- tiled two-kernel fallback (huge slabs) --------------- #
    if two_kernel_tile_l is not None:
        tile_l = two_kernel_tile_l
        assert Lp % tile_l == 0 and (tile_l % 128 == 0 or tile_l == Lp)
    else:
        tile_l = _pick_tile_l(Lp, C, itemsize, max_tile_bytes=max(work_budget // 6, C * 128 * itemsize))
    n_l = Lp // tile_l
    n_split = 2 if (n_l % 2 == 0 and n_l >= 2) else 1   # keep both v7x cores busy at small B
    n_l_per = n_l // n_split

    pooled = pl.pallas_call(
        functools.partial(_partial_pool_kernel, tile_l=tile_l, true_l=L,
                          needs_mask=needs_mask, n_l_per=n_l_per),
        out_shape=jax.ShapeDtypeStruct((B, n_split, C, 2), jnp.float32),
        grid=(B, n_split, n_l_per),
        in_specs=[pl.BlockSpec((1, C, tile_l),
                               lambda b, s, l: (b, 0, s * n_l_per + l))],
        out_specs=pl.BlockSpec((1, 1, C, 2), lambda b, s, l: (b, s, 0, 0)),
        scratch_shapes=[pltpu.VMEM((C, 128), jnp.float32),    # running sum
                        pltpu.VMEM((C, 128), jnp.float32)],   # running max
        compiler_params=pltpu.CompilerParams(
            dimension_semantics=("parallel", "parallel", "arbitrary"),
            vmem_limit_bytes=vmem_limit),
    )(xp)

    # Tiny shared MLP + sigmoid on the pooled stats in plain XLA (degenerate
    # MXU shapes are not worth a kernel here).
    w1f = w1.astype(jnp.float32)
    w2f = w2.astype(jnp.float32)
    sums = pooled[..., 0].sum(axis=1)              # (B, C)
    maxs = pooled[..., 1].max(axis=1)              # (B, C)
    avg = sums * (1.0 / L)

    def fc(v):
        return jnp.maximum(v @ w1f.T, 0.0) @ w2f.T

    att = jax.nn.sigmoid(fc(avg) + fc(maxs))[:, :, None]      # (B, C, 1) f32

    out_p = pl.pallas_call(
        _scale_kernel,
        out_shape=jax.ShapeDtypeStruct((B, C, Lp), x.dtype),
        grid=(B, n_l),
        in_specs=[pl.BlockSpec((1, C, tile_l), lambda b, l: (b, 0, l)),
                  pl.BlockSpec((1, C, 1), lambda b, l: (b, 0, 0))],
        out_specs=pl.BlockSpec((1, C, tile_l), lambda b, l: (b, 0, l)),
        compiler_params=pltpu.CompilerParams(
            dimension_semantics=("parallel", "parallel"),
            vmem_limit_bytes=vmem_limit),
    )(xp, att)
    return out_p if not needs_mask else out_p[:, :, :L]


# --------------------------- pure-JAX reference ------------------------------ #

def ref_forward(x, w1, w2):
    avg = jnp.mean(x, axis=2, keepdims=True)                    # (B, C, 1)
    mx = jnp.max(x, axis=2, keepdims=True)                      # (B, C, 1)

    def fc(v):
        h = jnp.maximum(jnp.einsum("rc,bcx->brx", w1, v), 0.0)
        return jnp.einsum("cr,brx->bcx", w2, h)

    return jax.nn.sigmoid(fc(avg) + fc(mx)) * x


# ---------------------------------- main ------------------------------------- #

if __name__ == "__main__":
    B, C, L = 2, 32, 512
    reduction_ratio = 16
    Cr = C // reduction_ratio

    key = jax.random.PRNGKey(0)
    k_x, k_w1, k_w2, k_x3 = jax.random.split(key, 4)
    x = jax.random.normal(k_x, (B, C, L), jnp.float32)
    w1 = jax.random.normal(k_w1, (Cr, C), jnp.float32) * 0.1    # Conv1d(C, C//16, 1, bias=False)
    w2 = jax.random.normal(k_w2, (C, Cr), jnp.float32) * 0.1    # Conv1d(C//16, C, 1, bias=False)

    ref = ref_forward(x, w1, w2)

    # 1) fused single-pass path (default).
    out = jax.block_until_ready(channel_attention_forward(x, w1, w2))
    assert out.shape == (B, C, L)
    assert jnp.allclose(out, ref, atol=2e-3, rtol=2e-3), "fused path mismatch vs reference"

    # 2) tiled two-kernel fallback, forced small tile so the pl.when
    #    accumulators, the L-split combine and the scale pass all run.
    out2 = jax.block_until_ready(
        channel_attention_forward(x, w1, w2, force_two_kernel=True, two_kernel_tile_l=128))
    assert jnp.allclose(out2, ref, atol=2e-3, rtol=2e-3), "fallback path mismatch vs reference"

    # 3) L not a multiple of 128 -> padded + masked path.
    L3 = 200
    x3 = jax.random.normal(k_x3, (B, C, L3), jnp.float32)
    out3 = jax.block_until_ready(channel_attention_forward(x3, w1, w2))
    assert out3.shape == (B, C, L3)
    assert jnp.allclose(out3, ref_forward(x3, w1, w2), atol=2e-3, rtol=2e-3), \
        "padded path mismatch vs reference"

    print("KERNEL_OK")
</pallas_src>

<mosaic_0001>
module attributes {stable_mosaic.version = 11 : i64} {
  func.func @_fused_kernel(%arg0: i32, %arg1: memref<1x32x512xf32, #tpu.memory_space<vmem>>, %arg2: memref<2x32xf32, #tpu.memory_space<vmem>>, %arg3: memref<32x2xf32, #tpu.memory_space<vmem>>, %arg4: memref<1x32x512xf32, #tpu.memory_space<vmem>>) attributes {dimension_semantics = [#tpu.dimension_semantics<parallel>], iteration_bounds = array<i64: 2>, scalar_prefetch = 0 : i64, scratch_operands = 0 : i64, tpu.core_type = #tpu.core_type<tc>, window_params = [{transform_indices = @transform_0, window_bounds = array<i64: 1, 32, 512>}, {pipeline_mode = #tpu.pipeline_mode<synchronous>, transform_indices = @transform_1, window_bounds = array<i64: 2, 32>}, {pipeline_mode = #tpu.pipeline_mode<synchronous>, transform_indices = @transform_2, window_bounds = array<i64: 32, 2>}, {transform_indices = @transform_3, window_bounds = array<i64: 1, 32, 512>}]} {
    %c0 = arith.constant 0 : index
    %c0_0 = arith.constant 0 : index
    %c0_1 = arith.constant 0 : index
    %0 = vector.load %arg1[%c0, %c0_0, %c0_1] : memref<1x32x512xf32, #tpu.memory_space<vmem>>, vector<1x32x512xf32>
    %1 = vector.shape_cast %0 : vector<1x32x512xf32> to vector<32x512xf32>
    %cst = arith.constant dense<0.000000e+00> : vector<32xf32>
    %2 = vector.multi_reduction <add>, %1, %cst [1] : vector<32x512xf32> to vector<32xf32>
    %3 = vector.shape_cast %2 : vector<32xf32> to vector<32x1xf32>
    %cst_2 = arith.constant 0.001953125 : f32
    %4 = vector.broadcast %cst_2 : f32 to vector<32x1xf32>
    %5 = arith.mulf %3, %4 : vector<32x1xf32>
    %cst_3 = arith.constant dense<0xFF800000> : vector<32xf32>
    %6 = vector.multi_reduction <maximumf>, %1, %cst_3 [1] : vector<32x512xf32> to vector<32xf32>
    %7 = vector.shape_cast %6 : vector<32xf32> to vector<32x1xf32>
    %c0_4 = arith.constant 0 : index
    %c0_5 = arith.constant 0 : index
    %8 = vector.load %arg2[%c0_4, %c0_5] : memref<2x32xf32, #tpu.memory_space<vmem>>, vector<2x32xf32>
    %c0_6 = arith.constant 0 : index
    %c0_7 = arith.constant 0 : index
    %9 = vector.load %arg3[%c0_6, %c0_7] : memref<32x2xf32, #tpu.memory_space<vmem>>, vector<32x2xf32>
    %10 = tpu.concatenate %5, %7 in 1 : vector<32x1xf32>, vector<32x1xf32> -> vector<32x2xf32>
    %cst_8 = arith.constant dense<0.000000e+00> : vector<2x2xf32>
    %11 = tpu.matmul %8, %10, %cst_8 {dimension_numbers = #tpu.dot_dimension_numbers<[1], [0], [0], [1], [0, 0, 1, 1], [], []>} : vector<2x32xf32>, vector<32x2xf32>, vector<2x2xf32> -> vector<2x2xf32>
    %cst_9 = arith.constant 0.000000e+00 : f32
    %12 = vector.broadcast %cst_9 : f32 to vector<2x2xf32>
    %13 = arith.maximumf %11, %12 : vector<2x2xf32>
    %cst_10 = arith.constant dense<0.000000e+00> : vector<2xf32>
    %14 = vector.multi_reduction <add>, %13, %cst_10 [1] : vector<2x2xf32> to vector<2xf32>
    %15 = vector.shape_cast %14 : vector<2xf32> to vector<2x1xf32>
    %cst_11 = arith.constant dense<0.000000e+00> : vector<32x1xf32>
    %16 = tpu.matmul %9, %15, %cst_11 {dimension_numbers = #tpu.dot_dimension_numbers<[1], [0], [0], [1], [0, 0, 1, 1], [], []>} : vector<32x2xf32>, vector<2x1xf32>, vector<32x1xf32> -> vector<32x1xf32>
    %17 = arith.negf %16 : vector<32x1xf32>
    %18 = math.exp %17 : vector<32x1xf32>
    %cst_12 = arith.constant 1.000000e+00 : f32
    %19 = vector.broadcast %cst_12 : f32 to vector<32x1xf32>
    %20 = arith.addf %19, %18 : vector<32x1xf32>
    %21 = arith.divf %19, %20 : vector<32x1xf32>
    %22 = vector.broadcast %21 : vector<32x1xf32> to vector<32x512xf32>
    %23 = arith.mulf %1, %22 : vector<32x512xf32>
    %c0_13 = arith.constant 0 : index
    %c0_14 = arith.constant 0 : index
    %c0_15 = arith.constant 0 : index
    %24 = vector.load %arg4[%c0_13, %c0_14, %c0_15] : memref<1x32x512xf32, #tpu.memory_space<vmem>>, vector<1x32x512xf32>
    %25 = vector.shape_cast %24 : vector<1x32x512xf32> to vector<32x512xf32>
    %26 = vector.shape_cast %23 : vector<32x512xf32> to vector<1x32x512xf32>
    tpu.vector_store %arg4[%c0_13, %c0_14, %c0_15], %26 {strides = array<i32>} : memref<1x32x512xf32, #tpu.memory_space<vmem>>, vector<1x32x512xf32>,
    return
  }
  func.func @transform_0(%arg0: i32) -> (i32, i32, i32) {
    %c0_i32 = arith.constant 0 : i32
    %c0_i32_0 = arith.constant 0 : i32
    %c0_i32_1 = arith.constant 0 : i32
    return %arg0, %c0_i32, %c0_i32_0 : i32, i32, i32
  }
  func.func @transform_1(%arg0: i32) -> (i32, i32) {
    %c0_i32 = arith.constant 0 : i32
    %c0_i32_0 = arith.constant 0 : i32
    %c0_i32_1 = arith.constant 0 : i32
    return %c0_i32, %c0_i32_0 : i32, i32
  }
  func.func @transform_2(%arg0: i32) -> (i32, i32) {
    %c0_i32 = arith.constant 0 : i32
    %c0_i32_0 = arith.constant 0 : i32
    %c0_i32_1 = arith.constant 0 : i32
    return %c0_i32, %c0_i32_0 : i32, i32
  }
  func.func @transform_3(%arg0: i32) -> (i32, i32, i32) {
    %c0_i32 = arith.constant 0 : i32
    %c0_i32_0 = arith.constant 0 : i32
    %c0_i32_1 = arith.constant 0 : i32
    return %arg0, %c0_i32, %c0_i32_0 : i32, i32, i32
  }
}

</mosaic_0001>

<llo_original>
// kernel: tpu_custom_call.1
$region0: #{tpu_custom_call.1}
  #allocation0 [shape = 'u32[]', space=smem, size = 0x4, offset = 0x4, fixed_abs, tag = 'smem constant byte address 0x4 - core index']
  #allocation1 [shape = 'u32[72,128]{1,0:T(1,128)}', space=vmem, size = 0x9000, scoped, tag = 'internal scratch']
  %s0 = inlined_call_operand.hbm [shape: f32[2,32,512], index: 0, kind: input, shape index: {}]
  %s1 = inlined_call_operand.vmem [shape: f32[2,32], index: 1, kind: input, shape index: {}]
  %s2 = inlined_call_operand.vmem [shape: f32[32,2], index: 2, kind: input, shape index: {}]
  %s3 = inlined_call_operand.hbm [shape: f32[2,32,512], index: 3, kind: output, shape index: {}]
  %s4 = sld [smem:[#allocation0]]
  $region49: #{tpu_custom_call.1} parent=0
    _
  %s6 = ssub.s32 1, %s4
  %s7 = scalar_select 0, %s6, %s4
  $region1: #{tpu_custom_call.1} parent=0
    #allocation2 [shape = 'u8[131072]{0}', space=vmem, size = 0x20000, scoped, tag = 'input window, operand 0']
    #allocation3 [shape = 's32[2]{0}', space=sflag, size = 0x8, scoped, tag = 'scoped memory for tpu_custom_call.1']
    #allocation4 [shape = 's32[2]{0}', space=sflag, size = 0x8, scoped, tag = 'scoped memory for tpu_custom_call.1']
    #allocation5 [shape = 'u8[131072]{0}', space=vmem, size = 0x20000, scoped, tag = 'output window, operand 0']
    %8 = vsyncpa [#allocation3], 0
    %s9 = scalar_lea.sflag [#allocation3], 1
    %10 = vsyncpa %s9, 0
    %11 = vsyncpa [#allocation4], 0
    %s12 = scalar_lea.sflag [#allocation4], 1
    %13 = vsyncpa %s12, 0
    loop: start=0, step=1, limit=4
    $region2: #{tpu_custom_call.1} parent=1 // loop_pre_header
      _
    $region3: #{tpu_custom_call.1} parent=1 // loop_header
      %s15 = sphi 0, %s19
      %p16 = scmp.ge.s32.totalorder %s15, 4
      %s25 = sphi 0, %s27
      %s28 = sphi 0, %s25
      %s29 = sphi 0, %s28
      %s45 = sphi 0, %s29
      %s49 = sphi 0, %s49
      %s51 = sphi 0, %s49
      %s52 = sphi 0, %s51
      %s66 = sphi 0, %s52
      %s70 = sphi 0, %s70
      %s72 = sphi 0, %s70
      %s73 = sphi 0, %s72
      %s87 = sphi 0, %s73
      %s93 = sphi 0, %s95
      %s96 = sphi 0, %s93
      %s97 = sphi 0, %s96
      %s113 = sphi 0, %s97
    $region4: #{tpu_custom_call.1} parent=1 // loop_header_branch
      %18 = sbr.rel (%p16) target = $region8
    $region5: #{tpu_custom_call.1} parent=1 // loop_body
      %s20 = ssub.s32 %s15, 1
      %s21 = ssub.s32 %s15, 2
      %s22 = sadd.s32 %s15, 1
      %s23 = ssub.s32 %s15, %s22
      %p24 = scmp.eq.s32.totalorder %s23, 0
      %s26 = sadd.s32 %s25, 1
      %s27 = scalar_select %p24, %s25, %s26
      %p30 = pneg %p24
      %p31 = scmp.eq.s32.totalorder %s15, 1
      %p32 = por %p30, %p31
      %p33 = scmp.ne.s32.totalorder %s25, %s28
      %p34 = scmp.eq.s32.totalorder %s15, 0
      %p35 = por %p33, %p34
      %p36 = scmp.ne.s32.totalorder %s25, %s28
      %p37 = scmp.eq.s32.totalorder %s20, 1
      %p38 = por %p36, %p37
      %p39 = scmp.ne.s32.totalorder %s28, %s29
      %p40 = scmp.eq.s32.totalorder %s20, 0
      %p41 = por %p39, %p40
      %p42 = scmp.ne.s32.totalorder %s28, %s29
      %p43 = scmp.eq.s32.totalorder %s21, 1
      %p44 = por %p42, %p43
      %p46 = scmp.ne.s32.totalorder %s29, %s45
      %p47 = scmp.eq.s32.totalorder %s21, 0
      %p48 = por %p46, %p47
      %s50 = sadd.s32 %s49, 1
      %p53 = scmp.eq.s32.totalorder %s15, 1
      %p54 = scmp.ne.s32.totalorder %s49, %s51
      %p55 = scmp.eq.s32.totalorder %s15, 0
      %p56 = por %p54, %p55
      %p57 = scmp.ne.s32.totalorder %s49, %s51
      %p58 = scmp.eq.s32.totalorder %s20, 1
      %p59 = por %p57, %p58
      %p60 = scmp.ne.s32.totalorder %s51, %s52
      %p61 = scmp.eq.s32.totalorder %s20, 0
      %p62 = por %p60, %p61
      %p63 = scmp.ne.s32.totalorder %s51, %s52
      %p64 = scmp.eq.s32.totalorder %s21, 1
      %p65 = por %p63, %p64
      %p67 = scmp.ne.s32.totalorder %s52, %s66
      %p68 = scmp.eq.s32.totalorder %s21, 0
      %p69 = por %p67, %p68
      %s71 = sadd.s32 %s70, 1
      %p74 = scmp.eq.s32.totalorder %s15, 1
      %p75 = scmp.ne.s32.totalorder %s70, %s72
      %p76 = scmp.eq.s32.totalorder %s15, 0
      %p77 = por %p75, %p76
      %p78 = scmp.ne.s32.totalorder %s70, %s72
      %p79 = scmp.eq.s32.totalorder %s20, 1
      %p80 = por %p78, %p79
      %p81 = scmp.ne.s32.totalorder %s72, %s73
      %p82 = scmp.eq.s32.totalorder %s20, 0
      %p83 = por %p81, %p82
      %p84 = scmp.ne.s32.totalorder %s72, %s73
      %p85 = scmp.eq.s32.totalorder %s21, 1
      %p86 = por %p84, %p85
      %p88 = scmp.ne.s32.totalorder %s73, %s87
      %p89 = scmp.eq.s32.totalorder %s21, 0
      %p90 = por %p88, %p89
      %s91 = ssub.s32 %s15, %s22
      %p92 = scmp.eq.s32.totalorder %s91, 0
      %s94 = sadd.s32 %s93, 1
      %s95 = scalar_select %p92, %s93, %s94
      %p98 = pneg %p92
      %p99 = scmp.eq.s32.totalorder %s15, 1
      %p100 = por %p98, %p99
      %p101 = scmp.ne.s32.totalorder %s93, %s96
      %p102 = scmp.eq.s32.totalorder %s15, 0
      %p103 = por %p101, %p102
      %p104 = scmp.ne.s32.totalorder %s93, %s96
      %p105 = scmp.eq.s32.totalorder %s20, 1
      %p106 = por %p104, %p105
      %p107 = scmp.ne.s32.totalorder %s96, %s97
      %p108 = scmp.eq.s32.totalorder %s20, 0
      %p109 = por %p107, %p108
      %p110 = scmp.ne.s32.totalorder %s96, %s97
      %p111 = scmp.eq.s32.totalorder %s21, 1
      %p112 = por %p110, %p111
      %p114 = scmp.ne.s32.totalorder %s97, %s113
      %p115 = scmp.eq.s32.totalorder %s21, 0
      %p116 = por %p114, %p115
      %p117 = scmp.le.s32.totalorder 1, %s15
      %p118 = scmp.lt.s32.totalorder %s15, 3
      %p119 = pnand %p117, %p118
      %p120 = pneg %p119
      // Predicated region
      $region9: #{tpu_custom_call.1} parent=5 // pred_check
        _
      $region10: #{tpu_custom_call.1} parent=5 // pred_check_branch
        %122 = sbr.rel (%p119) target = $region12
      $region11: #{tpu_custom_call.1} parent=5 // pred_region
        %s123 = ssub.s32 %s15, 1
        // Predicated region
        $region13: #{tpu_custom_call.1} parent=11 // pred_check
          %p124 = pneg %p62
        $region14: #{tpu_custom_call.1} parent=11 // pred_check_branch
          %126 = sbr.rel (%p124) target = $region16
        $region15: #{tpu_custom_call.1} parent=11 // pred_region
          _
        $region16: #{tpu_custom_call.1} parent=11 // pred_fallthru
          _
        // Predicated region
        $region17: #{tpu_custom_call.1} parent=11 // pred_check
          %p127 = pneg %p83
        $region18: #{tpu_custom_call.1} parent=11 // pred_check_branch
          %129 = sbr.rel (%p127) target = $region20
        $region19: #{tpu_custom_call.1} parent=11 // pred_region
          _
        $region20: #{tpu_custom_call.1} parent=11 // pred_fallthru
          _
      $region12: #{tpu_custom_call.1} parent=5 // pred_fallthru
        _
      %p130 = scmp.lt.s32.totalorder %s15, 2
      // Predicated region
      $region21: #{tpu_custom_call.1} parent=5 // pred_check
        %p131 = pneg %p130
      $region22: #{tpu_custom_call.1} parent=5 // pred_check_branch
        %133 = sbr.rel (%p131) target = $region24
      $region23: #{tpu_custom_call.1} parent=5 // pred_region
        // Predicated region
        $region25: #{tpu_custom_call.1} parent=23 // pred_check
          %p134 = pneg %p35
        $region26: #{tpu_custom_call.1} parent=23 // pred_check_branch
          %136 = sbr.rel (%p134) target = $region28
        $region27: #{tpu_custom_call.1} parent=23 // pred_region
          %s137 = sand.u32 %s25, 1
          %s138 = scalar_lea.sflag [#allocation3], %s137
          %s139 = sand.u32 %s25, 1
          %s140 = smul.addr %s139, 128
          %s141 = scalar_lea.vmem [#allocation2], %s140
          %143 = vsyncadd %s138, 0
          %s144 = smul.addr %s15, 16
          %s145 = smul.addr %s144, 8
          %s146 = scalar_lea.hbm %s0, %s145
          %s147 = sshll.u32 %s146, 4
          %s148 = int_to_ptr.hbm [resolvable:$true] %s147
          %s149 = sshll.u32 %s141, 4
          %s150 = int_to_ptr.vmem [resolvable:$true] %s149
          %155 = dma.hbm_to_vmem [thread:$0]  %s148, 2048, %s150, %s138, 512, 512, 32
        $region28: #{tpu_custom_call.1} parent=23 // pred_fallthru
          _
      $region24: #{tpu_custom_call.1} parent=5 // pred_fallthru
        _
      %p156 = scmp.le.s32.totalorder 1, %s15
      %p157 = scmp.lt.s32.totalorder %s15, 3
      %p158 = pnand %p156, %p157
      %p159 = pneg %p158
      // Predicated region
      $region29: #{tpu_custom_call.1} parent=5 // pred_check
        _
      $region30: #{tpu_custom_call.1} parent=5 // pred_check_branch
        %161 = sbr.rel (%p158) target = $region32
      $region31: #{tpu_custom_call.1} parent=5 // pred_region
        %s162 = ssub.s32 %s15, 1
        %s163 = sand.u32 %s28, 1
        %s164 = scalar_lea.sflag [#allocation3], %s163
        %s165 = sand.u32 %s28, 1
        %s166 = smul.addr %s165, 128
        %s167 = scalar_lea.vmem [#allocation2], %s166
        // Predicated region
        $region33: #{tpu_custom_call.1} parent=31 // pred_check
          %p168 = pneg %p41
        $region34: #{tpu_custom_call.1} parent=31 // pred_check_branch
          %170 = sbr.rel (%p168) target = $region36
        $region35: #{tpu_custom_call.1} parent=31 // pred_region
          %172 = dma.done %s164, 2048
        $region36: #{tpu_custom_call.1} parent=31 // pred_fallthru
          _
        %s173 = sand.u32 %s28, 1
        %s174 = scalar_lea.sflag [#allocation3], %s173
        %s175 = sand.u32 %s28, 1
        %s176 = smul.addr %s175, 128
        %s177 = scalar_lea.vmem [#allocation2], %s176
        %p178 = pneg %p41
        %p179 = pneg %p38
        %p180 = pneg %p62
        %p181 = pneg %p59
        %p182 = pneg %p83
        %p183 = pneg %p80
        %p184 = pneg %p109
        %p185 = pneg %p106
        %s186 = sand.u32 %s96, 1
        %s187 = scalar_lea.sflag [#allocation4], %s186
        %s188 = sand.u32 %s96, 1
        %s189 = smul.addr %s188, 128
        %s190 = scalar_lea.vmem [#allocation5], %s189
        %v191 = vld [vmem:[%s167] sm:$0xff]
        %v192 = vld [vmem:[%s167 + $0x8] sm:$0xff]
        %v193 = vld [vmem:[%s167 + $0x10] sm:$0xff]
        %v194 = vld [vmem:[%s167 + $0x18] sm:$0xff]
        %v195 = vld [vmem:[%s167 + $0x20] sm:$0xff]
        %v196 = vld [vmem:[%s167 + $0x28] sm:$0xff]
        %v197 = vld [vmem:[%s167 + $0x30] sm:$0xff]
        %v198 = vld [vmem:[%s167 + $0x38] sm:$0xff]
        %v199 = vld [vmem:[%s167 + $0x40] sm:$0xff]
        %v200 = vld [vmem:[%s167 + $0x48] sm:$0xff]
        %v201 = vld [vmem:[%s167 + $0x50] sm:$0xff]
        %v202 = vld [vmem:[%s167 + $0x58] sm:$0xff]
        %v203 = vld [vmem:[%s167 + $0x60] sm:$0xff]
        %v204 = vld [vmem:[%s167 + $0x68] sm:$0xff]
        %v205 = vld [vmem:[%s167 + $0x70] sm:$0xff]
        %v206 = vld [vmem:[%s167 + $0x78] sm:$0xff]
        %v207 = vadd.f32 %v191, %v192
        %v208 = vadd.f32 %v207, %v193
        %v209 = vadd.f32 %v208, %v194
        %210 = vadd.xlane.f32.xlu0 %v209
        %v211 = vpop.xlane.xlu0 %210
        %v212 = vadd.f32 %v195, %v196
        %v213 = vadd.f32 %v212, %v197
        %v214 = vadd.f32 %v213, %v198
        %215 = vadd.xlane.f32.xlu0 %v214
        %v216 = vpop.xlane.xlu0 %215
        %v217 = vadd.f32 %v199, %v200
        %v218 = vadd.f32 %v217, %v201
        %v219 = vadd.f32 %v218, %v202
        %220 = vadd.xlane.f32.xlu0 %v219
        %v221 = vpop.xlane.xlu0 %220
        %v222 = vadd.f32 %v203, %v204
        %v223 = vadd.f32 %v222, %v205
        %v224 = vadd.f32 %v223, %v206
        %225 = vadd.xlane.f32.xlu0 %v224
        %v226 = vpop.xlane.xlu0 %225
        %v227 = vmul.f32 %v211, 0.001953125
        %v228 = vmul.f32 %v216, 0.001953125
        %v229 = vmul.f32 %v221, 0.001953125
        %v230 = vmul.f32 %v226, 0.001953125
        %v231 = vmax.f32 %v191, %v192
        %v232 = vmax.f32 %v231, %v193
        %v233 = vmax.f32 %v232, %v194
        %234 = vmax.xlane.f32.xlu0 %v233
        %v235 = vpop.xlane.xlu0 %234
        %v236 = vmax.f32 %v195, %v196
        %v237 = vmax.f32 %v236, %v197
        %v238 = vmax.f32 %v237, %v198
        %239 = vmax.xlane.f32.xlu0 %v238
        %v240 = vpop.xlane.xlu0 %239
        %v241 = vmax.f32 %v199, %v200
        %v242 = vmax.f32 %v241, %v201
        %v243 = vmax.f32 %v242, %v202
        %244 = vmax.xlane.f32.xlu0 %v243
        %v245 = vpop.xlane.xlu0 %244
        %v246 = vmax.f32 %v203, %v204
        %v247 = vmax.f32 %v246, %v205
        %v248 = vmax.f32 %v247, %v206
        %249 = vmax.xlane.f32.xlu0 %v248
        %v250 = vpop.xlane.xlu0 %249
        %v251 = vld [vmem:[%s1] sm:$0x3]
        %v252 = vld [vmem:[%s2] sm:$0xff]
        %v253 = vld [vmem:[%s2 + $0x8] sm:$0xff]
        %v254 = vld [vmem:[%s2 + $0x10] sm:$0xff]
        %v255 = vld [vmem:[%s2 + $0x18] sm:$0xff]
        %vm256 = vcmask 7168
        %v257 = vsel %vm256, %v227, %v235
        %v258 = vsel %vm256, %v228, %v240
        %v259 = vsel %vm256, %v229, %v245
        %v260 = vsel %vm256, %v230, %v250
        %vm261 = vcmask 261120
        %v263 = vsel %vm261, %v251, 0
        %265 = vmatpush.msra.mxu0 0.0
        %266 = vmatpush.msra.mxu0 0.0
        %267 = vmatpush.msra.mxu0 0.0
        %268 = vmatpush.msra.mxu0 0.0
        %269 = vmatpush.msra.mxu0 0.0
        %270 = vmatpush.msra.mxu0 0.0
        %271 = vmatpush.msra.mxu0 0.0
        %272 = vmatpush.msra.mxu0 0.0
        %273 = vmatpush.msra.mxu0 0.0
        %274 = vmatpush.msra.mxu0 0.0
        %275 = vmatpush.msra.mxu0 0.0
        %276 = vmatpush.msra.mxu0 0.0
        %277 = vmatpush.msra.mxu0 %v260
        %278 = vmatpush.msra.mxu0 %v259
        %279 = vmatpush.msra.mxu0 %v258
        %280 = vmatpush.msra.mxu0 %v257
        %281 = vmatmul.f32.gmra.mxu0 %v263
        %v282 = vpop.f32.mrf.mxu0
        %v283 = vadd.f32 0.0, %v282
        %284 = vdwg.mxu0
        %v285 = vmax.f32 %v283, 0.0
        %vm286 = vcmask 9216
        %v287 = vsel %vm286, %v285, 0.0
        %288 = vadd.xlane.f32.xlu0 %v287
        %v289 = vpop.xlane.xlu0 %288
        %vm290 = vcmask 15360
        %v292 = vsel %vm290, %v252, 0
        %v295 = vsel %vm290, %v253, 0
        %v298 = vsel %vm290, %v254, 0
        %v301 = vsel %vm290, %v255, 0
        %vm303 = vcmask 1041408
        %v305 = vsel %vm303, %v289, 0
        %307 = vmatpush.msra.mxu0 0.0
        %308 = vmatpush.msra.mxu0 0.0
        %309 = vmatpush.msra.mxu0 0.0
        %310 = vmatpush.msra.mxu0 0.0
        %311 = vmatpush.msra.mxu0 0.0
        %312 = vmatpush.msra.mxu0 0.0
        %313 = vmatpush.msra.mxu0 0.0
        %314 = vmatpush.msra.mxu0 0.0
        %315 = vmatpush.msra.mxu0 0.0
        %316 = vmatpush.msra.mxu0 0.0
        %317 = vmatpush.msra.mxu0 0.0
        %318 = vmatpush.msra.mxu0 0.0
        %319 = vmatpush.msra.mxu0 0.0
        %320 = vmatpush.msra.mxu0 0.0
        %321 = vmatpush.msra.mxu0 0.0
        %322 = vmatpush.msra.mxu0 %v305
        %323 = vmatmul.f32.gmra.mxu0 %v292
        %v324 = vpop.f32.mrf.mxu0
        %v325 = vadd.f32 0.0, %v324
        %326 = vmatmul.f32.gmra.mxu0 %v295
        %v327 = vpop.f32.mrf.mxu0
        %v328 = vadd.f32 0.0, %v327
        %329 = vmatmul.f32.gmra.mxu0 %v298
        %v330 = vpop.f32.mrf.mxu0
        %v331 = vadd.f32 0.0, %v330
        %332 = vmatmul.f32.gmra.mxu0 %v301
        %v333 = vpop.f32.mrf.mxu0
        %v334 = vadd.f32 0.0, %v333
        %335 = vdwg.mxu0
        %v336 = vxor.u32 %v325, 2147483648
        %v337 = vxor.u32 %v328, 2147483648
        %v338 = vxor.u32 %v331, 2147483648
        %v339 = vxor.u32 %v334, 2147483648
        %v340 = vmul.f32 %v336, 1.442695
        %v341 = vpow.pop %v340
        %v342 = vmul.f32 %v337, 1.442695
        %v343 = vpow.pop %v342
        %v344 = vmul.f32 %v338, 1.442695
        %v345 = vpow.pop %v344
        %v346 = vmul.f32 %v339, 1.442695
        %v347 = vpow.pop %v346
        %v348 = vadd.f32 %v341, 1.0
        %v349 = vadd.f32 %v343, 1.0
        %v350 = vadd.f32 %v345, 1.0
        %v351 = vadd.f32 %v347, 1.0
        %v352 = vrcp.pop %v348
        %v353 = vmul.f32 %v348, %v352
        %v354 = vsub.f32 1.0, %v353
        %v355 = vmul.f32 %v352, %v354
        %v356 = vadd.f32 %v352, %v355
        %vm357 = vweird.f32 %v348
        %vm358 = vweird.f32 %v352
        %vm359 = vmor %vm357, %vm358
        %v360 = vsel %vm359, %v352, %v356
        %v361 = vand.u32 2147483647, %v348
        %vm362 = vcmp.eq.f32.partialorder %v361, 8.507059e+37
        %v363 = vand.u32 %v348, 2147483648
        %v364 = vor.u32 1.1754944e-38, %v363
        %v365 = vsel %vm362, %v364, %v360
        %v366 = vmul.f32 1.0, %v365
        %v367 = vrcp.pop %v349
        %v368 = vmul.f32 %v349, %v367
        %v369 = vsub.f32 1.0, %v368
        %v370 = vmul.f32 %v367, %v369
        %v371 = vadd.f32 %v367, %v370
        %vm372 = vweird.f32 %v349
        %vm373 = vweird.f32 %v367
        %vm374 = vmor %vm372, %vm373
        %v375 = vsel %vm374, %v367, %v371
        %v376 = vand.u32 2147483647, %v349
        %vm377 = vcmp.eq.f32.partialorder %v376, 8.507059e+37
        %v378 = vand.u32 %v349, 2147483648
        %v379 = vor.u32 1.1754944e-38, %v378
        %v380 = vsel %vm377, %v379, %v375
        %v381 = vmul.f32 1.0, %v380
        %v382 = vrcp.pop %v350
        %v383 = vmul.f32 %v350, %v382
        %v384 = vsub.f32 1.0, %v383
        %v385 = vmul.f32 %v382, %v384
        %v386 = vadd.f32 %v382, %v385
        %vm387 = vweird.f32 %v350
        %vm388 = vweird.f32 %v382
        %vm389 = vmor %vm387, %vm388
        %v390 = vsel %vm389, %v382, %v386
        %v391 = vand.u32 2147483647, %v350
        %vm392 = vcmp.eq.f32.partialorder %v391, 8.507059e+37
        %v393 = vand.u32 %v350, 2147483648
        %v394 = vor.u32 1.1754944e-38, %v393
        %v395 = vsel %vm392, %v394, %v390
        %v396 = vmul.f32 1.0, %v395
        %v397 = vrcp.pop %v351
        %v398 = vmul.f32 %v351, %v397
        %v399 = vsub.f32 1.0, %v398
        %v400 = vmul.f32 %v397, %v399
        %v401 = vadd.f32 %v397, %v400
        %vm402 = vweird.f32 %v351
        %vm403 = vweird.f32 %v397
        %vm404 = vmor %vm402, %vm403
        %v405 = vsel %vm404, %v397, %v401
        %v406 = vand.u32 2147483647, %v351
        %vm407 = vcmp.eq.f32.partialorder %v406, 8.507059e+37
        %v408 = vand.u32 %v351, 2147483648
        %v409 = vor.u32 1.1754944e-38, %v408
        %v410 = vsel %vm407, %v409, %v405
        %v411 = vmul.f32 1.0, %v410
        %413 = vset.pattern.permute.xlu0 0
        %414 = vperm.xlu0 %413, %v366
        %v415 = vpop.permute.xlu0 %414
        %418 = vset.pattern.permute.xlu0 0
        %419 = vperm.xlu0 %418, %v381
        %v420 = vpop.permute.xlu0 %419
        %423 = vset.pattern.permute.xlu0 0
        %424 = vperm.xlu0 %423, %v396
        %v425 = vpop.permute.xlu0 %424
        %428 = vset.pattern.permute.xlu0 0
        %429 = vperm.xlu0 %428, %v411
        %v430 = vpop.permute.xlu0 %429
        %v432 = vmul.f32 %v191, %v415
        %v433 = vmul.f32 %v192, %v415
        %v434 = vmul.f32 %v193, %v415
        %v435 = vmul.f32 %v194, %v415
        %v436 = vmul.f32 %v195, %v420
        %v437 = vmul.f32 %v196, %v420
        %v438 = vmul.f32 %v197, %v420
        %v439 = vmul.f32 %v198, %v420
        %v440 = vmul.f32 %v199, %v425
        %v441 = vmul.f32 %v200, %v425
        %v442 = vmul.f32 %v201, %v425
        %v443 = vmul.f32 %v202, %v425
        %v444 = vmul.f32 %v203, %v430
        %v445 = vmul.f32 %v204, %v430
        %v446 = vmul.f32 %v205, %v430
        %v447 = vmul.f32 %v206, %v430
        %448 = vst [vmem:[%s190] sm:$0xff] %v432
        %449 = vst [vmem:[%s190 + $0x8] sm:$0xff] %v433
        %450 = vst [vmem:[%s190 + $0x10] sm:$0xff] %v434
        %451 = vst [vmem:[%s190 + $0x18] sm:$0xff] %v435
        %452 = vst [vmem:[%s190 + $0x20] sm:$0xff] %v436
        %453 = vst [vmem:[%s190 + $0x28] sm:$0xff] %v437
        %454 = vst [vmem:[%s190 + $0x30] sm:$0xff] %v438
        %455 = vst [vmem:[%s190 + $0x38] sm:$0xff] %v439
        %456 = vst [vmem:[%s190 + $0x40] sm:$0xff] %v440
        %457 = vst [vmem:[%s190 + $0x48] sm:$0xff] %v441
        %458 = vst [vmem:[%s190 + $0x50] sm:$0xff] %v442
        %459 = vst [vmem:[%s190 + $0x58] sm:$0xff] %v443
        %460 = vst [vmem:[%s190 + $0x60] sm:$0xff] %v444
        %461 = vst [vmem:[%s190 + $0x68] sm:$0xff] %v445
        %462 = vst [vmem:[%s190 + $0x70] sm:$0xff] %v446
        %463 = vst [vmem:[%s190 + $0x78] sm:$0xff] %v447
        %s464 = sand.u32 %s96, 1
        %s465 = scalar_lea.sflag [#allocation4], %s464
        %s466 = sand.u32 %s96, 1
        %s467 = smul.addr %s466, 128
        %s468 = scalar_lea.vmem [#allocation5], %s467
        // Predicated region
        $region37: #{tpu_custom_call.1} parent=31 // pred_check
          %p469 = pneg %p106
        $region38: #{tpu_custom_call.1} parent=31 // pred_check_branch
          %471 = sbr.rel (%p469) target = $region40
        $region39: #{tpu_custom_call.1} parent=31 // pred_region
          %473 = vsyncadd %s465, 0
          %s474 = smul.addr %s20, 16
          %s475 = smul.addr %s474, 8
          %s476 = scalar_lea.hbm %s3, %s475
          %s477 = sshll.u32 %s468, 4
          %s478 = int_to_ptr.vmem [resolvable:$true] %s477
          %s479 = sshll.u32 %s476, 4
          %s480 = int_to_ptr.hbm [resolvable:$true] %s479
          %485 = dma.vmem_to_hbm [thread:$0]  %s478, 2048, %s480, %s465, 512, 512, 32
        $region40: #{tpu_custom_call.1} parent=31 // pred_fallthru
          _
      $region32: #{tpu_custom_call.1} parent=5 // pred_fallthru
        _
      %p486 = scmp.le.s32.totalorder 2, %s15
      // Predicated region
      $region41: #{tpu_custom_call.1} parent=5 // pred_check
        %p487 = pneg %p486
      $region42: #{tpu_custom_call.1} parent=5 // pred_check_branch
        %489 = sbr.rel (%p487) target = $region44
      $region43: #{tpu_custom_call.1} parent=5 // pred_region
        %s490 = ssub.s32 %s15, 2
        // Predicated region
        $region45: #{tpu_custom_call.1} parent=43 // pred_check
          %p491 = pneg %p112
        $region46: #{tpu_custom_call.1} parent=43 // pred_check_branch
          %493 = sbr.rel (%p491) target = $region48
        $region47: #{tpu_custom_call.1} parent=43 // pred_region
          %s494 = sand.u32 %s97, 1
          %s495 = scalar_lea.sflag [#allocation4], %s494
          %s496 = sand.u32 %s97, 1
          %s497 = smul.addr %s496, 128
          %s498 = scalar_lea.vmem [#allocation5], %s497
          %500 = dma.done %s495, 2048
        $region48: #{tpu_custom_call.1} parent=43 // pred_fallthru
          _
      $region44: #{tpu_custom_call.1} parent=5 // pred_fallthru
        _
    $region6: #{tpu_custom_call.1} parent=1 // loop_footer
      %s19 = sadd.s32 1, %s15
    $region7: #{tpu_custom_call.1} parent=1 // loop_footer_branch
      %14 = sbr.rel target = $region3
    $region8: #{tpu_custom_call.1} parent=1 // loop_exit
      _
    %501 = vsyncpa [#allocation3], 1
    %s502 = scalar_lea.sflag [#allocation3], 1
    %503 = vsyncpa %s502, 1
    %504 = vsyncpa [#allocation4], 1
    %s505 = scalar_lea.sflag [#allocation4], 1
    %506 = vsyncpa %s505, 1

</llo_original>
